<compile_context>
chip_gen: v5e
topology: v5e:2x2
jax: 0.10.0
libtpu: 0.0.40
codegen_flags: <defaults>
</compile_context>

<pallas_src>
import jax
import jax.numpy as jnp
from jax.experimental import pallas as pl
from jax.experimental.pallas import tpu as pltpu


def _col_filter(w, dtype):
    """(W, W) +/-1 matrix C so that X @ C = [pair-sum cols | pair-diff cols] (down-2).

    Low half  (output col j <  W/2): C[2j, j] = 1, C[2j+1, j] = 1
    High half (output col j >= W/2): C[2j', j] = 1, C[2j'+1, j] = -1  (j' = j - W/2)
    Signs/order match upfirdn2d(input, k, down=2) with the flipped Haar taps.
    """
    wh = w // 2
    i = jnp.arange(w)[:, None]          # input column
    j = jnp.arange(w)[None, :]          # output column
    low = j < wh
    jp = jnp.where(low, j, j - wh)
    even = (i == 2 * jp).astype(jnp.float32)
    odd = (i == 2 * jp + 1).astype(jnp.float32)
    sgn = jnp.where(low, 1.0, -1.0)
    return (even + odd * sgn).astype(dtype)


def _haar_kernel(c_ref, x_ref, o_ref):
    # c_ref: (W, W)  +/-1 column filter (constant index_map -> stays resident in VMEM)
    # x_ref: (TC, Th, W)  input slab
    # o_ref: (4, TC, Th//2, W//2)  band order: ll, lh, hl, hh
    tc, th, w = x_ref.shape
    thh, wh = th // 2, w // 2

    # Row-pair filter on the VPU: sublane-strided loads of even/odd rows, add/sub.
    xe = x_ref[:, pl.ds(0, thh, stride=2), :]      # even rows (TC, Th//2, W)
    xo = x_ref[:, pl.ds(1, thh, stride=2), :]      # odd rows  (TC, Th//2, W)
    rl = (xe + xo).reshape(tc * thh, w)            # row low-pass  (unscaled)
    rh = (xe - xo).reshape(tc * thh, w)            # row high-pass (unscaled)

    # Column-pair filter: one tall MXU matmul per row band against the +/-1 matrix,
    # f32 accumulation, single final 0.5 scale.
    cm = c_ref[...]
    yl = jnp.dot(rl, cm, preferred_element_type=jnp.float32)
    yh = jnp.dot(rh, cm, preferred_element_type=jnp.float32)
    yl = (0.5 * yl).reshape(tc, thh, w)            # columns: [ll | hl]
    yh = (0.5 * yh).reshape(tc, thh, w)            # columns: [lh | hh]

    o_ref[0] = yl[:, :, :wh].astype(o_ref.dtype)   # ll
    o_ref[1] = yh[:, :, :wh].astype(o_ref.dtype)   # lh
    o_ref[2] = yl[:, :, wh:].astype(o_ref.dtype)   # hl
    o_ref[3] = yh[:, :, wh:].astype(o_ref.dtype)   # hh


def _pick_row_tile(H, W, itemsize, target_bytes):
    """Largest row tile Th: prefer the full plane; else a dtype-aligned divisor of H."""
    if H * W * itemsize <= target_bytes:
        return H
    # Th must keep both Th and Th//2 legal sublane tiles for this dtype.
    align = 16 if itemsize >= 4 else (32 if itemsize == 2 else 64)
    best = None
    for th in range(align, H, align):
        if H % th == 0 and th * W * itemsize <= target_bytes:
            best = th
    return best if best is not None else H


def _pick_channel_tile(C, plane_bytes, target_bytes):
    """Largest channel tile TC dividing C with TC * plane_bytes under the target."""
    best = 1
    for tc in range(1, C + 1):
        if C % tc == 0 and tc * plane_bytes <= target_bytes:
            best = tc
    return best


def haar_transform(x):
    """x: (N, C, H, W) -> (N, 4*C, H//2, W//2), matching HaarTransform.forward."""
    N, C, H, W = x.shape
    assert H % 2 == 0 and W % 2 == 0, "spatial dims must be even"
    if x.dtype not in (jnp.bfloat16, jnp.float32):
        x = x.astype(jnp.float32)
    Hh, Wh = H // 2, W // 2
    itemsize = jnp.dtype(x.dtype).itemsize

    # Size tiles against the real per-core VMEM budget (64 MiB on v7x, 128 MiB v5e/v6e).
    try:
        vmem_cap = int(pltpu.get_tpu_info().vmem_capacity_bytes)
    except Exception:
        vmem_cap = 64 << 20
    target_bytes = max(1 << 20, min(8 << 20, vmem_cap // 16))

    Th = _pick_row_tile(H, W, itemsize, target_bytes)
    TC = _pick_channel_tile(C, Th * W * itemsize, target_bytes)
    Thh = Th // 2
    grid = (N, C // TC, H // Th)

    cmat = _col_filter(W, x.dtype)   # +/-1, exact in bf16

    # Per-step VMEM: double-buffered in/out blocks + kernel temporaries + resident filter.
    block_in = TC * Th * W * itemsize
    block_out = 4 * TC * Thh * Wh * itemsize
    interm = 2 * block_in + TC * Th * W * 4          # xe/xo/rl/rh + f32 matmul results
    needed = 2 * block_in + 2 * block_out + interm + 2 * W * W * itemsize + (4 << 20)
    vmem_limit = int(min(max(needed, 32 << 20), (vmem_cap * 3) // 4))

    out = pl.pallas_call(
        _haar_kernel,
        out_shape=jax.ShapeDtypeStruct((N, 4, C, Hh, Wh), x.dtype),
        grid=grid,
        in_specs=[
            # Constant block index -> fetched once, kept resident across the whole grid.
            pl.BlockSpec((W, W), lambda n, cb, hb: (0, 0)),
            pl.BlockSpec((None, TC, Th, W), lambda n, cb, hb: (n, cb, hb, 0)),
        ],
        out_specs=pl.BlockSpec(
            (None, 4, TC, Thh, Wh), lambda n, cb, hb: (n, 0, cb, hb, 0)),
        compiler_params=pltpu.CompilerParams(
            dimension_semantics=("parallel", "parallel", "parallel"),
            vmem_limit_bytes=vmem_limit),
    )(cmat, x)

    # torch.cat((ll, lh, hl, hh), 1) == this contiguous (free) reshape.
    return out.reshape(N, 4 * C, Hh, Wh)


def haar_reference(x):
    """Pure-JAX reference of upfirdn2d(input, haar_band_kernel, down=2) for each band."""
    a = x[:, :, 0::2, 0::2]
    b = x[:, :, 0::2, 1::2]
    c = x[:, :, 1::2, 0::2]
    d = x[:, :, 1::2, 1::2]
    ll = 0.5 * (a + b + c + d)
    lh = 0.5 * (a + b - c - d)
    hl = 0.5 * (a - b + c - d)
    hh = 0.5 * (a - b - c + d)
    return jnp.concatenate((ll, lh, hl, hh), axis=1)


if __name__ == "__main__":
    key = jax.random.PRNGKey(0)
    N, C, H, W = 2, 4, 16, 16
    x = jax.random.normal(key, (N, C, H, W), dtype=jnp.float32)

    out = jax.block_until_ready(haar_transform(x))

    assert out.shape == (N, 4 * C, H // 2, W // 2), out.shape
    ref = haar_reference(x)
    assert jnp.allclose(out, ref, atol=1e-5, rtol=1e-5), \
        float(jnp.max(jnp.abs(out - ref)))

    print("KERNEL_OK")
</pallas_src>

<mosaic_0001>
module attributes {stable_mosaic.version = 11 : i64} {
  func.func @_haar_kernel(%arg0: i32, %arg1: i32, %arg2: i32, %arg3: memref<16x16xf32, #tpu.memory_space<vmem>>, %arg4: memref<1x4x16x16xf32, #tpu.memory_space<vmem>>, %arg5: memref<1x4x4x8x8xf32, #tpu.memory_space<vmem>>) attributes {dimension_semantics = [#tpu.dimension_semantics<parallel>, #tpu.dimension_semantics<parallel>, #tpu.dimension_semantics<parallel>], iteration_bounds = array<i64: 2, 1, 1>, scalar_prefetch = 0 : i64, scratch_operands = 0 : i64, tpu.core_type = #tpu.core_type<tc>, window_params = [{pipeline_mode = #tpu.pipeline_mode<synchronous>, transform_indices = @transform_0, window_bounds = array<i64: 16, 16>}, {transform_indices = @transform_1, window_bounds = array<i64: 1, 4, 16, 16>}, {transform_indices = @transform_2, window_bounds = array<i64: 1, 4, 4, 8, 8>}]} {
    %c0 = arith.constant 0 : index
    %c0_0 = arith.constant 0 : index
    %c0_1 = arith.constant 0 : index
    %c0_2 = arith.constant 0 : index
    %0 = tpu.strided_load %arg4[%c0, %c0_0, %c0_1, %c0_2] {strides = array<i32: 1, 1, 2, 1>} : memref<1x4x16x16xf32, #tpu.memory_space<vmem>>, vector<1x4x8x16xf32>
    %1 = vector.shape_cast %0 : vector<1x4x8x16xf32> to vector<4x8x16xf32>
    %c0_3 = arith.constant 0 : index
    %c0_4 = arith.constant 0 : index
    %c1 = arith.constant 1 : index
    %c0_5 = arith.constant 0 : index
    %2 = tpu.strided_load %arg4[%c0_3, %c0_4, %c1, %c0_5] {strides = array<i32: 1, 1, 2, 1>} : memref<1x4x16x16xf32, #tpu.memory_space<vmem>>, vector<1x4x8x16xf32>
    %3 = vector.shape_cast %2 : vector<1x4x8x16xf32> to vector<4x8x16xf32>
    %4 = arith.addf %1, %3 : vector<4x8x16xf32>
    %5 = vector.shape_cast %4 : vector<4x8x16xf32> to vector<32x16xf32>
    %6 = arith.subf %1, %3 : vector<4x8x16xf32>
    %7 = vector.shape_cast %6 : vector<4x8x16xf32> to vector<32x16xf32>
    %c0_6 = arith.constant 0 : index
    %c0_7 = arith.constant 0 : index
    %8 = vector.load %arg3[%c0_6, %c0_7] : memref<16x16xf32, #tpu.memory_space<vmem>>, vector<16x16xf32>
    %cst = arith.constant dense<0.000000e+00> : vector<32x16xf32>
    %9 = tpu.matmul %5, %8, %cst {dimension_numbers = #tpu.dot_dimension_numbers<[1], [0], [0], [1], [0, 0, 1, 1], [], []>} : vector<32x16xf32>, vector<16x16xf32>, vector<32x16xf32> -> vector<32x16xf32>
    %cst_8 = arith.constant dense<0.000000e+00> : vector<32x16xf32>
    %10 = tpu.matmul %7, %8, %cst_8 {dimension_numbers = #tpu.dot_dimension_numbers<[1], [0], [0], [1], [0, 0, 1, 1], [], []>} : vector<32x16xf32>, vector<16x16xf32>, vector<32x16xf32> -> vector<32x16xf32>
    %cst_9 = arith.constant 5.000000e-01 : f32
    %11 = vector.broadcast %cst_9 : f32 to vector<32x16xf32>
    %12 = arith.mulf %11, %9 : vector<32x16xf32>
    %13 = vector.shape_cast %12 : vector<32x16xf32> to vector<4x8x16xf32>
    %cst_10 = arith.constant 5.000000e-01 : f32
    %14 = vector.broadcast %cst_10 : f32 to vector<32x16xf32>
    %15 = arith.mulf %14, %10 : vector<32x16xf32>
    %16 = vector.shape_cast %15 : vector<32x16xf32> to vector<4x8x16xf32>
    %17 = vector.extract_strided_slice %13 {offsets = [0, 0, 0], sizes = [4, 8, 8], strides = [1, 1, 1]} : vector<4x8x16xf32> to vector<4x8x8xf32>
    %c0_11 = arith.constant 0 : index
    %c0_12 = arith.constant 0 : index
    %c0_13 = arith.constant 0 : index
    %c0_14 = arith.constant 0 : index
    %c0_15 = arith.constant 0 : index
    %18 = vector.load %arg5[%c0_11, %c0_12, %c0_13, %c0_14, %c0_15] : memref<1x4x4x8x8xf32, #tpu.memory_space<vmem>>, vector<1x1x4x8x8xf32>
    %19 = vector.shape_cast %18 : vector<1x1x4x8x8xf32> to vector<4x8x8xf32>
    %20 = vector.shape_cast %17 : vector<4x8x8xf32> to vector<1x1x4x8x8xf32>
    tpu.vector_store %arg5[%c0_11, %c0_12, %c0_13, %c0_14, %c0_15], %20 {strides = array<i32>} : memref<1x4x4x8x8xf32, #tpu.memory_space<vmem>>, vector<1x1x4x8x8xf32>,
    %21 = vector.extract_strided_slice %16 {offsets = [0, 0, 0], sizes = [4, 8, 8], strides = [1, 1, 1]} : vector<4x8x16xf32> to vector<4x8x8xf32>
    %c0_16 = arith.constant 0 : index
    %c1_17 = arith.constant 1 : index
    %c0_18 = arith.constant 0 : index
    %c0_19 = arith.constant 0 : index
    %c0_20 = arith.constant 0 : index
    %22 = vector.load %arg5[%c0_16, %c1_17, %c0_18, %c0_19, %c0_20] : memref<1x4x4x8x8xf32, #tpu.memory_space<vmem>>, vector<1x1x4x8x8xf32>
    %23 = vector.shape_cast %22 : vector<1x1x4x8x8xf32> to vector<4x8x8xf32>
    %24 = vector.shape_cast %21 : vector<4x8x8xf32> to vector<1x1x4x8x8xf32>
    tpu.vector_store %arg5[%c0_16, %c1_17, %c0_18, %c0_19, %c0_20], %24 {strides = array<i32>} : memref<1x4x4x8x8xf32, #tpu.memory_space<vmem>>, vector<1x1x4x8x8xf32>,
    %25 = vector.extract_strided_slice %13 {offsets = [0, 0, 8], sizes = [4, 8, 8], strides = [1, 1, 1]} : vector<4x8x16xf32> to vector<4x8x8xf32>
    %c0_21 = arith.constant 0 : index
    %c2 = arith.constant 2 : index
    %c0_22 = arith.constant 0 : index
    %c0_23 = arith.constant 0 : index
    %c0_24 = arith.constant 0 : index
    %26 = vector.load %arg5[%c0_21, %c2, %c0_22, %c0_23, %c0_24] : memref<1x4x4x8x8xf32, #tpu.memory_space<vmem>>, vector<1x1x4x8x8xf32>
    %27 = vector.shape_cast %26 : vector<1x1x4x8x8xf32> to vector<4x8x8xf32>
    %28 = vector.shape_cast %25 : vector<4x8x8xf32> to vector<1x1x4x8x8xf32>
    tpu.vector_store %arg5[%c0_21, %c2, %c0_22, %c0_23, %c0_24], %28 {strides = array<i32>} : memref<1x4x4x8x8xf32, #tpu.memory_space<vmem>>, vector<1x1x4x8x8xf32>,
    %29 = vector.extract_strided_slice %16 {offsets = [0, 0, 8], sizes = [4, 8, 8], strides = [1, 1, 1]} : vector<4x8x16xf32> to vector<4x8x8xf32>
    %c0_25 = arith.constant 0 : index
    %c3 = arith.constant 3 : index
    %c0_26 = arith.constant 0 : index
    %c0_27 = arith.constant 0 : index
    %c0_28 = arith.constant 0 : index
    %30 = vector.load %arg5[%c0_25, %c3, %c0_26, %c0_27, %c0_28] : memref<1x4x4x8x8xf32, #tpu.memory_space<vmem>>, vector<1x1x4x8x8xf32>
    %31 = vector.shape_cast %30 : vector<1x1x4x8x8xf32> to vector<4x8x8xf32>
    %32 = vector.shape_cast %29 : vector<4x8x8xf32> to vector<1x1x4x8x8xf32>
    tpu.vector_store %arg5[%c0_25, %c3, %c0_26, %c0_27, %c0_28], %32 {strides = array<i32>} : memref<1x4x4x8x8xf32, #tpu.memory_space<vmem>>, vector<1x1x4x8x8xf32>,
    return
  }
  func.func @transform_0(%arg0: i32, %arg1: i32, %arg2: i32) -> (i32, i32) {
    %c0_i32 = arith.constant 0 : i32
    %c0_i32_0 = arith.constant 0 : i32
    %c0_i32_1 = arith.constant 0 : i32
    return %c0_i32, %c0_i32_0 : i32, i32
  }
  func.func @transform_1(%arg0: i32, %arg1: i32, %arg2: i32) -> (i32, i32, i32, i32) {
    %c0_i32 = arith.constant 0 : i32
    %c0_i32_0 = arith.constant 0 : i32
    return %arg0, %arg1, %arg2, %c0_i32 : i32, i32, i32, i32
  }
  func.func @transform_2(%arg0: i32, %arg1: i32, %arg2: i32) -> (i32, i32, i32, i32, i32) {
    %c0_i32 = arith.constant 0 : i32
    %c0_i32_0 = arith.constant 0 : i32
    %c0_i32_1 = arith.constant 0 : i32
    return %arg0, %c0_i32, %arg1, %arg2, %c0_i32_0 : i32, i32, i32, i32, i32
  }
}

</mosaic_0001>

<llo_original>
// kernel: tpu_custom_call.1
$region0: #{tpu_custom_call.1}
  #allocation0 [shape = 'u32[]', space=smem, size = 0x4, offset = 0x4, fixed_abs, tag = 'smem constant byte address 0x4 - core index']
  #allocation1 [shape = 'u32[72,128]{1,0:T(1,128)}', space=vmem, size = 0x9000, scoped, tag = 'internal scratch']
  %s0 = inlined_call_operand.hbm [shape: f32[16,16], index: 0, kind: input, shape index: {}]
  %s1 = inlined_call_operand.hbm [shape: f32[2,4,16,16], index: 1, kind: input, shape index: {}]
  %s2 = inlined_call_operand.hbm [shape: f32[2,4,4,8,8], index: 2, kind: output, shape index: {}]
  %s3 = sld [smem:[#allocation0]]
  $region49: #{tpu_custom_call.1} parent=0
    _
  %s5 = ssub.s32 1, %s3
  %s6 = scalar_select 0, %s5, %s3
  $region1: #{tpu_custom_call.1} parent=0
    #allocation2 [shape = 'u8[8192]{0}', space=vmem, size = 0x2000, scoped, tag = 'input window, operand 0, single buffered']
    #allocation3 [shape = 's32[2]{0}', space=sflag, size = 0x8, scoped, tag = 'scoped memory for tpu_custom_call.1']
    #allocation4 [shape = 's32[2]{0}', space=sflag, size = 0x8, scoped, tag = 'scoped memory for tpu_custom_call.1']
    #allocation5 [shape = 'u8[65536]{0}', space=vmem, size = 0x10000, scoped, tag = 'input window, operand 1']
    #allocation6 [shape = 's32[2]{0}', space=sflag, size = 0x8, scoped, tag = 'scoped memory for tpu_custom_call.1']
    #allocation7 [shape = 'u8[131072]{0}', space=vmem, size = 0x20000, scoped, tag = 'output window, operand 0']
    %7 = vsyncpa [#allocation3], 0
    %8 = vsyncpa [#allocation6], 0
    %s9 = scalar_lea.sflag [#allocation6], 1
    %10 = vsyncpa %s9, 0
    %11 = vsyncpa [#allocation4], 0
    %s12 = scalar_lea.sflag [#allocation4], 1
    %13 = vsyncpa %s12, 0
    loop: start=0, step=1, limit=4
    $region2: #{tpu_custom_call.1} parent=1 // loop_pre_header
      _
    $region3: #{tpu_custom_call.1} parent=1 // loop_header
      %s15 = sphi 0, %s19
      %p16 = scmp.ge.s32.totalorder %s15, 4
      %s22 = sphi 0, %s41
      %s23 = sphi 0, %s37
      %s24 = sphi 0, %s33
      %s25 = sphi 0, %s22
      %s26 = sphi 0, %s23
      %s27 = sphi 0, %s24
      %s28 = sphi 0, %s25
      %s29 = sphi 0, %s26
      %s30 = sphi 0, %s27
      %s42 = sphi 0, %s42
      %s44 = sphi 0, %s42
      %s45 = sphi 0, %s44
      %s59 = sphi 0, %s45
      %s69 = sphi 0, %s71
      %s72 = sphi 0, %s69
      %s73 = sphi 0, %s72
      %s89 = sphi 0, %s73
      %s99 = sphi 0, %s101
      %s102 = sphi 0, %s99
      %s103 = sphi 0, %s102
      %s119 = sphi 0, %s103
    $region4: #{tpu_custom_call.1} parent=1 // loop_header_branch
      %18 = sbr.rel (%p16) target = $region8
    $region5: #{tpu_custom_call.1} parent=1 // loop_body
      %s20 = ssub.s32 %s15, 1
      %s21 = ssub.s32 %s15, 2
      %s31 = sadd.s32 1, %s24
      %p32 = scmp.ge.s32.totalorder %s31, 1
      %s33 = scalar_select %p32, 0, %s31
      %s34 = sadd.s32 1, %s23
      %s35 = scalar_select %p32, %s34, %s23
      %p36 = scmp.ge.s32.totalorder %s35, 1
      %s37 = scalar_select %p36, 0, %s35
      %s38 = sadd.s32 1, %s22
      %s39 = scalar_select %p36, %s38, %s22
      %p40 = scmp.ge.s32.totalorder %s39, 2
      %s41 = scalar_select %p40, 0, %s39
      %s43 = sadd.s32 %s42, 1
      %p46 = scmp.eq.s32.totalorder %s15, 1
      %p47 = scmp.ne.s32.totalorder %s42, %s44
      %p48 = scmp.eq.s32.totalorder %s15, 0
      %p49 = por %p47, %p48
      %p50 = scmp.ne.s32.totalorder %s42, %s44
      %p51 = scmp.eq.s32.totalorder %s20, 1
      %p52 = por %p50, %p51
      %p53 = scmp.ne.s32.totalorder %s44, %s45
      %p54 = scmp.eq.s32.totalorder %s20, 0
      %p55 = por %p53, %p54
      %p56 = scmp.ne.s32.totalorder %s44, %s45
      %p57 = scmp.eq.s32.totalorder %s21, 1
      %p58 = por %p56, %p57
      %p60 = scmp.ne.s32.totalorder %s45, %s59
      %p61 = scmp.eq.s32.totalorder %s21, 0
      %p62 = por %p60, %p61
      %s63 = ssub.s32 %s22, %s41
      %s64 = ssub.s32 %s23, %s37
      %s65 = sor.u32 %s63, %s64
      %s66 = ssub.s32 %s24, %s33
      %s67 = sor.u32 %s65, %s66
      %p68 = scmp.eq.s32.totalorder %s67, 0
      %s70 = sadd.s32 %s69, 1
      %s71 = scalar_select %p68, %s69, %s70
      %p74 = pneg %p68
      %p75 = scmp.eq.s32.totalorder %s15, 1
      %p76 = por %p74, %p75
      %p77 = scmp.ne.s32.totalorder %s69, %s72
      %p78 = scmp.eq.s32.totalorder %s15, 0
      %p79 = por %p77, %p78
      %p80 = scmp.ne.s32.totalorder %s69, %s72
      %p81 = scmp.eq.s32.totalorder %s20, 1
      %p82 = por %p80, %p81
      %p83 = scmp.ne.s32.totalorder %s72, %s73
      %p84 = scmp.eq.s32.totalorder %s20, 0
      %p85 = por %p83, %p84
      %p86 = scmp.ne.s32.totalorder %s72, %s73
      %p87 = scmp.eq.s32.totalorder %s21, 1
      %p88 = por %p86, %p87
      %p90 = scmp.ne.s32.totalorder %s73, %s89
      %p91 = scmp.eq.s32.totalorder %s21, 0
      %p92 = por %p90, %p91
      %s93 = ssub.s32 %s22, %s41
      %s94 = ssub.s32 %s23, %s37
      %s95 = sor.u32 %s93, %s94
      %s96 = ssub.s32 %s24, %s33
      %s97 = sor.u32 %s95, %s96
      %p98 = scmp.eq.s32.totalorder %s97, 0
      %s100 = sadd.s32 %s99, 1
      %s101 = scalar_select %p98, %s99, %s100
      %p104 = pneg %p98
      %p105 = scmp.eq.s32.totalorder %s15, 1
      %p106 = por %p104, %p105
      %p107 = scmp.ne.s32.totalorder %s99, %s102
      %p108 = scmp.eq.s32.totalorder %s15, 0
      %p109 = por %p107, %p108
      %p110 = scmp.ne.s32.totalorder %s99, %s102
      %p111 = scmp.eq.s32.totalorder %s20, 1
      %p112 = por %p110, %p111
      %p113 = scmp.ne.s32.totalorder %s102, %s103
      %p114 = scmp.eq.s32.totalorder %s20, 0
      %p115 = por %p113, %p114
      %p116 = scmp.ne.s32.totalorder %s102, %s103
      %p117 = scmp.eq.s32.totalorder %s21, 1
      %p118 = por %p116, %p117
      %p120 = scmp.ne.s32.totalorder %s103, %s119
      %p121 = scmp.eq.s32.totalorder %s21, 0
      %p122 = por %p120, %p121
      %p123 = scmp.le.s32.totalorder 1, %s15
      %p124 = scmp.lt.s32.totalorder %s15, 3
      %p125 = pnand %p123, %p124
      %p126 = pneg %p125
      // Predicated region
      $region9: #{tpu_custom_call.1} parent=5 // pred_check
        _
      $region10: #{tpu_custom_call.1} parent=5 // pred_check_branch
        %128 = sbr.rel (%p125) target = $region12
      $region11: #{tpu_custom_call.1} parent=5 // pred_region
        %s129 = ssub.s32 %s15, 1
        // Predicated region
        $region13: #{tpu_custom_call.1} parent=11 // pred_check
          %p130 = pneg %p55
        $region14: #{tpu_custom_call.1} parent=11 // pred_check_branch
          %132 = sbr.rel (%p130) target = $region16
        $region15: #{tpu_custom_call.1} parent=11 // pred_region
          %134 = vsyncadd [#allocation3], 0
          %s135 = sshll.u32 %s0, 4
          %s136 = int_to_ptr.hbm [resolvable:$true] %s135
          %s137 = sshll.u32 [#allocation2], 4
          %s138 = int_to_ptr.vmem [resolvable:$true] %s137
          %143 = dma.hbm_to_vmem [thread:$0]  %s136, 256, %s138, [#allocation3], 128, 128, 8
        $region16: #{tpu_custom_call.1} parent=11 // pred_fallthru
          _
      $region12: #{tpu_custom_call.1} parent=5 // pred_fallthru
        _
      %p144 = scmp.lt.s32.totalorder %s15, 2
      // Predicated region
      $region17: #{tpu_custom_call.1} parent=5 // pred_check
        %p145 = pneg %p144
      $region18: #{tpu_custom_call.1} parent=5 // pred_check_branch
        %147 = sbr.rel (%p145) target = $region20
      $region19: #{tpu_custom_call.1} parent=5 // pred_region
        // Predicated region
        $region21: #{tpu_custom_call.1} parent=19 // pred_check
          %p148 = pneg %p79
        $region22: #{tpu_custom_call.1} parent=19 // pred_check_branch
          %150 = sbr.rel (%p148) target = $region24
        $region23: #{tpu_custom_call.1} parent=19 // pred_region
          %s151 = sand.u32 %s69, 1
          %s152 = scalar_lea.sflag [#allocation6], %s151
          %s153 = sand.u32 %s69, 1
          %s154 = smul.addr %s153, 64
          %s155 = scalar_lea.vmem [#allocation5], %s154
          %s156 = smul.u32 4, %s23
          %s157 = smul.u32 2, %s24
          %159 = vsyncadd %s152, 0
          %s160 = smul.addr %s156, 2
          %s161 = sadd.s32 %s157, %s160
          %s162 = smul.addr %s22, 8
          %s163 = sadd.s32 %s161, %s162
          %s164 = smul.addr %s163, 8
          %s165 = scalar_lea.hbm %s1, %s164
          %s166 = sshll.u32 %s165, 4
          %s167 = int_to_ptr.hbm [resolvable:$true] %s166
          %s168 = sshll.u32 %s155, 4
          %s169 = int_to_ptr.vmem [resolvable:$true] %s168
          %174 = dma.hbm_to_vmem [thread:$0]  %s167, 1024, %s169, %s152, 128, 128, 8
        $region24: #{tpu_custom_call.1} parent=19 // pred_fallthru
          _
      $region20: #{tpu_custom_call.1} parent=5 // pred_fallthru
        _
      %p175 = scmp.le.s32.totalorder 1, %s15
      %p176 = scmp.lt.s32.totalorder %s15, 3
      %p177 = pnand %p175, %p176
      %p178 = pneg %p177
      // Predicated region
      $region25: #{tpu_custom_call.1} parent=5 // pred_check
        _
      $region26: #{tpu_custom_call.1} parent=5 // pred_check_branch
        %180 = sbr.rel (%p177) target = $region28
      $region27: #{tpu_custom_call.1} parent=5 // pred_region
        %s181 = ssub.s32 %s15, 1
        // Predicated region
        $region29: #{tpu_custom_call.1} parent=27 // pred_check
          %p182 = pneg %p55
        $region30: #{tpu_custom_call.1} parent=27 // pred_check_branch
          %184 = sbr.rel (%p182) target = $region32
        $region31: #{tpu_custom_call.1} parent=27 // pred_region
          %186 = dma.done [#allocation3], 256
        $region32: #{tpu_custom_call.1} parent=27 // pred_fallthru
          _
        %s187 = sand.u32 %s72, 1
        %s188 = scalar_lea.sflag [#allocation6], %s187
        %s189 = sand.u32 %s72, 1
        %s190 = smul.addr %s189, 64
        %s191 = scalar_lea.vmem [#allocation5], %s190
        // Predicated region
        $region33: #{tpu_custom_call.1} parent=27 // pred_check
          %p192 = pneg %p85
        $region34: #{tpu_custom_call.1} parent=27 // pred_check_branch
          %194 = sbr.rel (%p192) target = $region36
        $region35: #{tpu_custom_call.1} parent=27 // pred_region
          %196 = dma.done %s188, 1024
        $region36: #{tpu_custom_call.1} parent=27 // pred_fallthru
          _
        %p197 = pneg %p55
        %p198 = pneg %p52
        %s199 = sand.u32 %s72, 1
        %s200 = scalar_lea.sflag [#allocation6], %s199
        %s201 = sand.u32 %s72, 1
        %s202 = smul.addr %s201, 64
        %s203 = scalar_lea.vmem [#allocation5], %s202
        %p204 = pneg %p85
        %p205 = pneg %p82
        %p206 = pneg %p115
        %p207 = pneg %p112
        %s208 = sand.u32 %s102, 1
        %s209 = scalar_lea.sflag [#allocation4], %s208
        %s210 = sand.u32 %s102, 1
        %s211 = smul.addr %s210, 128
        %s212 = scalar_lea.vmem [#allocation7], %s211
        %s213 = smul.u32 4, %s26
        %s214 = smul.u32 2, %s27
        %s215 = smul.u32 4, %s26
        %v216 = vld [vmem:[%s191] ss:$2 sm:$0xff]
        %s217 = scalar_lea.vmem %s191, 16 [#allocation5]
        %v218 = vld [vmem:[%s217] ss:$2 sm:$0xff]
        %s219 = scalar_lea.vmem %s191, 32 [#allocation5]
        %v220 = vld [vmem:[%s219] ss:$2 sm:$0xff]
        %s221 = scalar_lea.vmem %s191, 48 [#allocation5]
        %v222 = vld [vmem:[%s221] ss:$2 sm:$0xff]
        %s223 = scalar_lea.vmem %s191, 1 [#allocation5]
        %v224 = vld [vmem:[%s223] ss:$2 sm:$0xff]
        %s225 = scalar_lea.vmem %s191, 17 [#allocation5]
        %v226 = vld [vmem:[%s225] ss:$2 sm:$0xff]
        %s227 = scalar_lea.vmem %s191, 33 [#allocation5]
        %v228 = vld [vmem:[%s227] ss:$2 sm:$0xff]
        %s229 = scalar_lea.vmem %s191, 49 [#allocation5]
        %v230 = vld [vmem:[%s229] ss:$2 sm:$0xff]
        %v231 = vadd.f32 %v216, %v224
        %v232 = vadd.f32 %v218, %v226
        %v233 = vadd.f32 %v220, %v228
        %v234 = vadd.f32 %v222, %v230
        %v235 = vsub.f32 %v216, %v224
        %v236 = vsub.f32 %v218, %v226
        %v237 = vsub.f32 %v220, %v228
        %v238 = vsub.f32 %v222, %v230
        %v239 = vld [vmem:[#allocation2] sm:$0xff]
        %v240 = vld [vmem:[#allocation2 + $0x8] sm:$0xff]
        %vm241 = vcmask 130048
        %v243 = vsel %vm241, %v231, 0
        %v246 = vsel %vm241, %v232, 0
        %v249 = vsel %vm241, %v233, 0
        %v252 = vsel %vm241, %v234, 0
        %254 = vmatpush.msra.mxu0 0.0
        %255 = vmatpush.msra.mxu0 0.0
        %256 = vmatpush.msra.mxu0 0.0
        %257 = vmatpush.msra.mxu0 0.0
        %258 = vmatpush.msra.mxu0 0.0
        %259 = vmatpush.msra.mxu0 0.0
        %260 = vmatpush.msra.mxu0 0.0
        %261 = vmatpush.msra.mxu0 0.0
        %262 = vmatpush.msra.mxu0 0.0
        %263 = vmatpush.msra.mxu0 0.0
        %264 = vmatpush.msra.mxu0 0.0
        %265 = vmatpush.msra.mxu0 0.0
        %266 = vmatpush.msra.mxu0 0.0
        %267 = vmatpush.msra.mxu0 0.0
        %268 = vmatpush.msra.mxu0 %v240
        %269 = vmatpush.msra.mxu0 %v239
        %270 = vmatmul.f32.gmra.mxu0 %v243
        %v271 = vpop.f32.mrf.mxu0
        %v272 = vadd.f32 0.0, %v271
        %273 = vmatmul.f32.gmra.mxu0 %v246
        %v274 = vpop.f32.mrf.mxu0
        %v275 = vadd.f32 0.0, %v274
        %276 = vmatmul.f32.gmra.mxu0 %v249
        %v277 = vpop.f32.mrf.mxu0
        %v278 = vadd.f32 0.0, %v277
        %279 = vmatmul.f32.gmra.mxu0 %v252
        %v280 = vpop.f32.mrf.mxu0
        %v281 = vadd.f32 0.0, %v280
        %282 = vdwg.mxu0
        %v284 = vsel %vm241, %v235, 0
        %v287 = vsel %vm241, %v236, 0
        %v290 = vsel %vm241, %v237, 0
        %v293 = vsel %vm241, %v238, 0
        %295 = vmatpush.msra.mxu0 0.0
        %296 = vmatpush.msra.mxu0 0.0
        %297 = vmatpush.msra.mxu0 0.0
        %298 = vmatpush.msra.mxu0 0.0
        %299 = vmatpush.msra.mxu0 0.0
        %300 = vmatpush.msra.mxu0 0.0
        %301 = vmatpush.msra.mxu0 0.0
        %302 = vmatpush.msra.mxu0 0.0
        %303 = vmatpush.msra.mxu0 0.0
        %304 = vmatpush.msra.mxu0 0.0
        %305 = vmatpush.msra.mxu0 0.0
        %306 = vmatpush.msra.mxu0 0.0
        %307 = vmatpush.msra.mxu0 0.0
        %308 = vmatpush.msra.mxu0 0.0
        %309 = vmatpush.msra.mxu0 %v240
        %310 = vmatpush.msra.mxu0 %v239
        %311 = vmatmul.f32.gmra.mxu0 %v284
        %v312 = vpop.f32.mrf.mxu0
        %v313 = vadd.f32 0.0, %v312
        %314 = vmatmul.f32.gmra.mxu0 %v287
        %v315 = vpop.f32.mrf.mxu0
        %v316 = vadd.f32 0.0, %v315
        %317 = vmatmul.f32.gmra.mxu0 %v290
        %v318 = vpop.f32.mrf.mxu0
        %v319 = vadd.f32 0.0, %v318
        %320 = vmatmul.f32.gmra.mxu0 %v293
        %v321 = vpop.f32.mrf.mxu0
        %v322 = vadd.f32 0.0, %v321
        %323 = vdwg.mxu0
        %v324 = vmul.f32 %v272, 0.5
        %v325 = vmul.f32 %v275, 0.5
        %v326 = vmul.f32 %v278, 0.5
        %v327 = vmul.f32 %v281, 0.5
        %v328 = vmul.f32 %v313, 0.5
        %v329 = vmul.f32 %v316, 0.5
        %v330 = vmul.f32 %v319, 0.5
        %v331 = vmul.f32 %v322, 0.5
        %vm332 = vcmask 64512
        %333 = vst.msk [vmem:[%s212] sm:$0xff] %vm332, %v324
        %334 = vst.msk [vmem:[%s212 + $0x8] sm:$0xff] %vm332, %v325
        %335 = vst.msk [vmem:[%s212 + $0x10] sm:$0xff] %vm332, %v326
        %336 = vst.msk [vmem:[%s212 + $0x18] sm:$0xff] %vm332, %v327
        %s337 = scalar_lea.vmem %s212, 32 [#allocation7]
        %338 = vst.msk [vmem:[%s337] sm:$0xff] %vm332, %v328
        %339 = vst.msk [vmem:[%s337 + $0x8] sm:$0xff] %vm332, %v329
        %340 = vst.msk [vmem:[%s337 + $0x10] sm:$0xff] %vm332, %v330
        %341 = vst.msk [vmem:[%s337 + $0x18] sm:$0xff] %vm332, %v331
        %346 = vrot.lane.b32.xlu0 %v324, 120
        %v347 = vpop.permute.xlu0 %346
        %348 = vrot.lane.b32.xlu0 %v325, 120
        %v349 = vpop.permute.xlu0 %348
        %350 = vrot.lane.b32.xlu0 %v326, 120
        %v351 = vpop.permute.xlu0 %350
        %352 = vrot.lane.b32.xlu0 %v327, 120
        %v353 = vpop.permute.xlu0 %352
        %s358 = scalar_lea.vmem %s212, 64 [#allocation7]
        %359 = vst.msk [vmem:[%s358] sm:$0xff] %vm332, %v347
        %360 = vst.msk [vmem:[%s358 + $0x8] sm:$0xff] %vm332, %v349
        %361 = vst.msk [vmem:[%s358 + $0x10] sm:$0xff] %vm332, %v351
        %362 = vst.msk [vmem:[%s358 + $0x18] sm:$0xff] %vm332, %v353
        %367 = vrot.lane.b32.xlu0 %v328, 120
        %v368 = vpop.permute.xlu0 %367
        %369 = vrot.lane.b32.xlu0 %v329, 120
        %v370 = vpop.permute.xlu0 %369
        %371 = vrot.lane.b32.xlu0 %v330, 120
        %v372 = vpop.permute.xlu0 %371
        %373 = vrot.lane.b32.xlu0 %v331, 120
        %v374 = vpop.permute.xlu0 %373
        %s379 = scalar_lea.vmem %s212, 96 [#allocation7]
        %380 = vst.msk [vmem:[%s379] sm:$0xff] %vm332, %v368
        %381 = vst.msk [vmem:[%s379 + $0x8] sm:$0xff] %vm332, %v370
        %382 = vst.msk [vmem:[%s379 + $0x10] sm:$0xff] %vm332, %v372
        %383 = vst.msk [vmem:[%s379 + $0x18] sm:$0xff] %vm332, %v374
        %s384 = sand.u32 %s102, 1
        %s385 = scalar_lea.sflag [#allocation4], %s384
        %s386 = sand.u32 %s102, 1
        %s387 = smul.addr %s386, 128
        %s388 = scalar_lea.vmem [#allocation7], %s387
        // Predicated region
        $region37: #{tpu_custom_call.1} parent=27 // pred_check
          %p389 = pneg %p112
        $region38: #{tpu_custom_call.1} parent=27 // pred_check_branch
          %391 = sbr.rel (%p389) target = $region40
        $region39: #{tpu_custom_call.1} parent=27 // pred_region
          %s392 = smul.u32 4, %s26
          %394 = vsyncadd %s385, 0
          %s395 = sadd.s32 %s27, %s392
          %s396 = smul.addr %s25, 16
          %s397 = sadd.s32 %s395, %s396
          %s398 = smul.addr %s397, 8
          %s399 = scalar_lea.hbm %s2, %s398
          %s400 = sshll.u32 %s388, 4
          %s401 = int_to_ptr.vmem [resolvable:$true] %s400
          %s402 = sshll.u32 %s399, 4
          %s403 = int_to_ptr.hbm [resolvable:$true] %s402
          %408 = dma.vmem_to_hbm [thread:$0]  %s401, 2048, %s403, %s385, 128, 128, 8
        $region40: #{tpu_custom_call.1} parent=27 // pred_fallthru
          _
      $region28: #{tpu_custom_call.1} parent=5 // pred_fallthru
        _
      %p409 = scmp.le.s32.totalorder 2, %s15
      // Predicated region
      $region41: #{tpu_custom_call.1} parent=5 // pred_check
        %p410 = pneg %p409
      $region42: #{tpu_custom_call.1} parent=5 // pred_check_branch
        %412 = sbr.rel (%p410) target = $region44
      $region43: #{tpu_custom_call.1} parent=5 // pred_region
        %s413 = ssub.s32 %s15, 2
        // Predicated region
        $region45: #{tpu_custom_call.1} parent=43 // pred_check
          %p414 = pneg %p118
        $region46: #{tpu_custom_call.1} parent=43 // pred_check_branch
          %416 = sbr.rel (%p414) target = $region48
        $region47: #{tpu_custom_call.1} parent=43 // pred_region
          %s417 = sand.u32 %s103, 1
          %s418 = scalar_lea.sflag [#allocation4], %s417
          %s419 = sand.u32 %s103, 1
          %s420 = smul.addr %s419, 128
          %s421 = scalar_lea.vmem [#allocation7], %s420
          %423 = dma.done %s418, 2048
        $region48: #{tpu_custom_call.1} parent=43 // pred_fallthru
          _
      $region44: #{tpu_custom_call.1} parent=5 // pred_fallthru
        _
    $region6: #{tpu_custom_call.1} parent=1 // loop_footer
      %s19 = sadd.s32 1, %s15
    $region7: #{tpu_custom_call.1} parent=1 // loop_footer_branch
      %14 = sbr.rel target = $region3
    $region8: #{tpu_custom_call.1} parent=1 // loop_exit
      _
    %424 = vsyncpa [#allocation3], 1
    %s425 = scalar_lea.sflag [#allocation3], 1
    %426 = vsyncpa %s425, 1
    %427 = vsyncpa [#allocation6], 1
    %s428 = scalar_lea.sflag [#allocation6], 1
    %429 = vsyncpa %s428, 1
    %430 = vsyncpa [#allocation4], 1
    %s431 = scalar_lea.sflag [#allocation4], 1
    %432 = vsyncpa %s431, 1

</llo_original>
